<compile_context>
chip_gen: v7x
topology: tpu7x:2x2x1
jax: 0.10.0
libtpu: 0.0.40
codegen_flags: <defaults>
</compile_context>

<pallas_src>
import functools

import jax
import jax.numpy as jnp
from jax.experimental import pallas as pl
from jax.experimental.pallas import tpu as pltpu


NEGATIVE_SLOPE = 0.01  # nn.LeakyReLU default


def _mlp_kernel(num_layers, has_mask, *refs):
    """refs = (x_ref, [mask_ref], w0, b0, ..., w_{L-1}, b_{L-1}, o_ref).

    One TM-row tile per grid step: chained matmuls + bias adds, LeakyReLU
    between hidden layers, final linear, optional masked zero-out.
    """
    x_ref = refs[0]
    idx = 1
    if has_mask:
        mask_ref = refs[idx]
        idx += 1
    o_ref = refs[-1]
    wb = refs[idx:-1]

    x = x_ref[...]
    for i in range(num_layers):
        w = wb[2 * i][...]                            # (in, out), native dtype
        b = wb[2 * i + 1][...].astype(jnp.float32)    # (1, out)
        x = jnp.dot(x, w, preferred_element_type=jnp.float32) + b
        if i < num_layers - 1:
            # LeakyReLU (f32 on the VPU; safe on v5e which has no bf16 VPU)
            x = jnp.where(x >= 0, x, NEGATIVE_SLOPE * x)

    if has_mask:
        # torch.where(mask, x, 0); mask broadcasts over the feature axis
        x = jnp.where(mask_ref[...] != 0, x, jnp.zeros_like(x))

    o_ref[...] = x.astype(o_ref.dtype)


def basic_mlp_pallas(x, weights, biases, mask=None, tile_m=512):
    """x: (..., num_in); weights[i]: (out_i, in_i) torch-style; biases[i]: (out_i,).

    mask: optional boolean array of shape (...,) or (..., 1) over leading dims.
    Returns (..., num_out) in x.dtype.
    """
    num_layers = len(weights)
    num_in = x.shape[-1]
    num_out = weights[-1].shape[0]

    lead_shape = x.shape[:-1]
    M = 1
    for d in lead_shape:
        M *= d
    x2 = x.reshape(M, num_in)

    has_mask = mask is not None
    mask2 = None
    if has_mask:
        m = jnp.asarray(mask)
        if m.ndim == len(lead_shape):            # (...,) -> (..., 1)
            m = m[..., None]
        m = jnp.broadcast_to(m, lead_shape + (1,))
        mask2 = m.reshape(M, 1).astype(jnp.int32)

    # Row-tile size: multiple of 8 sublanes, capped so small problems use one tile.
    TM = max(8, min(int(tile_m), int(pl.cdiv(M, 8)) * 8))
    M_pad = int(pl.cdiv(M, TM)) * TM
    if M_pad != M:
        x2 = jnp.pad(x2, ((0, M_pad - M), (0, 0)))
        if has_mask:
            mask2 = jnp.pad(mask2, ((0, M_pad - M), (0, 0)))

    grid = (M_pad // TM,)

    # Pre-transpose weights to (in, out), biases to (1, out); keep native dtype.
    wts = [jnp.asarray(w).T for w in weights]
    bss = [jnp.asarray(b).reshape(1, -1) for b in biases]

    operands = [x2]
    in_specs = [pl.BlockSpec((TM, num_in), lambda i: (i, 0))]
    if has_mask:
        operands.append(mask2)
        in_specs.append(pl.BlockSpec((TM, 1), lambda i: (i, 0)))
    for w, b in zip(wts, bss):
        operands.append(w)
        in_specs.append(pl.BlockSpec(w.shape, lambda i: (0, 0)))  # VMEM-resident
        operands.append(b)
        in_specs.append(pl.BlockSpec(b.shape, lambda i: (0, 0)))  # VMEM-resident

    out = pl.pallas_call(
        functools.partial(_mlp_kernel, num_layers, has_mask),
        out_shape=jax.ShapeDtypeStruct((M_pad, num_out), x.dtype),
        grid=grid,
        in_specs=in_specs,
        out_specs=pl.BlockSpec((TM, num_out), lambda i: (i, 0)),
        compiler_params=pltpu.CompilerParams(
            dimension_semantics=("parallel",),     # megacore sharding on v7x
            vmem_limit_bytes=32 * 1024 * 1024,     # safe on v5e/v6e/v7x
        ),
    )(*operands)

    out = out[:M]
    return out.reshape(lead_shape + (num_out,))


def basic_mlp_ref(x, weights, biases, mask=None):
    """Pure-JAX reference mirroring the PyTorch forward exactly."""
    h = x.astype(jnp.float32)
    for i, (w, b) in enumerate(zip(weights, biases)):
        h = h @ jnp.asarray(w, jnp.float32).T + jnp.asarray(b, jnp.float32)
        if i < len(weights) - 1:
            h = jnp.where(h >= 0, h, NEGATIVE_SLOPE * h)
    if mask is not None:
        m = mask if mask.ndim == h.ndim else mask[..., None]
        h = jnp.where(m, h, jnp.zeros((), h.dtype))
    return h.astype(x.dtype)


if __name__ == "__main__":
    # BasicMLP(num_in=32, num_out=16, num_hidden=2, layer_width=64,
    #          activation='leakyrelu')
    num_in, num_out, num_hidden, layer_width = 32, 16, 2, 64
    B, S = 2, 8

    key = jax.random.PRNGKey(0)
    keys = jax.random.split(key, 2 * (num_hidden + 1) + 2)

    # Deterministic parameter init (torch-style Linear shapes: (out, in)).
    dims = [num_in] + [layer_width] * num_hidden + [num_out]
    weights, biases = [], []
    for i in range(num_hidden + 1):
        fan_in = dims[i]
        bound = 1.0 / (fan_in ** 0.5)
        w = jax.random.uniform(keys[2 * i], (dims[i + 1], dims[i]),
                               jnp.float32, -bound, bound)
        b = jax.random.uniform(keys[2 * i + 1], (dims[i + 1],),
                               jnp.float32, -bound, bound)
        weights.append(w)
        biases.append(b)

    x = jax.random.normal(keys[-2], (B, S, num_in), jnp.float32)
    mask = jax.random.bernoulli(keys[-1], 0.7, (B, S, 1))

    # With mask
    out = basic_mlp_pallas(x, weights, biases, mask=mask)
    out = jax.block_until_ready(out)
    ref = basic_mlp_ref(x, weights, biases, mask=mask)
    assert out.shape == (B, S, num_out), out.shape
    assert jnp.allclose(out, ref, atol=1e-5, rtol=1e-5), \
        float(jnp.max(jnp.abs(out - ref)))

    # Without mask (mask path compiled out)
    out_nm = basic_mlp_pallas(x, weights, biases, mask=None)
    out_nm = jax.block_until_ready(out_nm)
    ref_nm = basic_mlp_ref(x, weights, biases, mask=None)
    assert jnp.allclose(out_nm, ref_nm, atol=1e-5, rtol=1e-5), \
        float(jnp.max(jnp.abs(out_nm - ref_nm)))

    print("KERNEL_OK")
</pallas_src>

<mosaic_0001>
module attributes {stable_mosaic.version = 11 : i64} {
  func.func @_mlp_kernel(%arg0: i32, %arg1: memref<16x32xf32, #tpu.memory_space<vmem>>, %arg2: memref<16x1xi32, #tpu.memory_space<vmem>>, %arg3: memref<32x64xf32, #tpu.memory_space<vmem>>, %arg4: memref<1x64xf32, #tpu.memory_space<vmem>>, %arg5: memref<64x64xf32, #tpu.memory_space<vmem>>, %arg6: memref<1x64xf32, #tpu.memory_space<vmem>>, %arg7: memref<64x16xf32, #tpu.memory_space<vmem>>, %arg8: memref<1x16xf32, #tpu.memory_space<vmem>>, %arg9: memref<16x16xf32, #tpu.memory_space<vmem>>) attributes {dimension_semantics = [#tpu.dimension_semantics<parallel>], iteration_bounds = array<i64: 1>, scalar_prefetch = 0 : i64, scratch_operands = 0 : i64, tpu.core_type = #tpu.core_type<tc>, window_params = [{transform_indices = @transform_0, window_bounds = array<i64: 16, 32>}, {transform_indices = @transform_1, window_bounds = array<i64: 16, 1>}, {pipeline_mode = #tpu.pipeline_mode<synchronous>, transform_indices = @transform_2, window_bounds = array<i64: 32, 64>}, {pipeline_mode = #tpu.pipeline_mode<synchronous>, transform_indices = @transform_3, window_bounds = array<i64: 1, 64>}, {pipeline_mode = #tpu.pipeline_mode<synchronous>, transform_indices = @transform_4, window_bounds = array<i64: 64, 64>}, {pipeline_mode = #tpu.pipeline_mode<synchronous>, transform_indices = @transform_5, window_bounds = array<i64: 1, 64>}, {pipeline_mode = #tpu.pipeline_mode<synchronous>, transform_indices = @transform_6, window_bounds = array<i64: 64, 16>}, {pipeline_mode = #tpu.pipeline_mode<synchronous>, transform_indices = @transform_7, window_bounds = array<i64: 1, 16>}, {transform_indices = @transform_8, window_bounds = array<i64: 16, 16>}]} {
    %c0 = arith.constant 0 : index
    %c0_0 = arith.constant 0 : index
    %0 = vector.load %arg1[%c0, %c0_0] : memref<16x32xf32, #tpu.memory_space<vmem>>, vector<16x32xf32>
    %c0_1 = arith.constant 0 : index
    %c0_2 = arith.constant 0 : index
    %1 = vector.load %arg3[%c0_1, %c0_2] : memref<32x64xf32, #tpu.memory_space<vmem>>, vector<32x64xf32>
    %c0_3 = arith.constant 0 : index
    %c0_4 = arith.constant 0 : index
    %2 = vector.load %arg4[%c0_3, %c0_4] : memref<1x64xf32, #tpu.memory_space<vmem>>, vector<1x64xf32>
    %cst = arith.constant dense<0.000000e+00> : vector<16x64xf32>
    %3 = tpu.matmul %0, %1, %cst {dimension_numbers = #tpu.dot_dimension_numbers<[1], [0], [0], [1], [0, 0, 1, 1], [], []>} : vector<16x32xf32>, vector<32x64xf32>, vector<16x64xf32> -> vector<16x64xf32>
    %4 = vector.broadcast %2 : vector<1x64xf32> to vector<16x64xf32>
    %5 = arith.addf %3, %4 : vector<16x64xf32>
    %cst_5 = arith.constant 0.000000e+00 : f32
    %6 = vector.broadcast %cst_5 : f32 to vector<16x64xf32>
    %7 = arith.cmpf oge, %5, %6 : vector<16x64xf32>
    %cst_6 = arith.constant 0.00999999977 : f32
    %8 = vector.broadcast %cst_6 : f32 to vector<16x64xf32>
    %9 = arith.mulf %8, %5 : vector<16x64xf32>
    %10 = arith.select %7, %5, %9 : vector<16x64xi1>, vector<16x64xf32>
    %c0_7 = arith.constant 0 : index
    %c0_8 = arith.constant 0 : index
    %11 = vector.load %arg5[%c0_7, %c0_8] : memref<64x64xf32, #tpu.memory_space<vmem>>, vector<64x64xf32>
    %c0_9 = arith.constant 0 : index
    %c0_10 = arith.constant 0 : index
    %12 = vector.load %arg6[%c0_9, %c0_10] : memref<1x64xf32, #tpu.memory_space<vmem>>, vector<1x64xf32>
    %cst_11 = arith.constant dense<0.000000e+00> : vector<16x64xf32>
    %13 = tpu.matmul %10, %11, %cst_11 {dimension_numbers = #tpu.dot_dimension_numbers<[1], [0], [0], [1], [0, 0, 1, 1], [], []>} : vector<16x64xf32>, vector<64x64xf32>, vector<16x64xf32> -> vector<16x64xf32>
    %14 = vector.broadcast %12 : vector<1x64xf32> to vector<16x64xf32>
    %15 = arith.addf %13, %14 : vector<16x64xf32>
    %cst_12 = arith.constant 0.000000e+00 : f32
    %16 = vector.broadcast %cst_12 : f32 to vector<16x64xf32>
    %17 = arith.cmpf oge, %15, %16 : vector<16x64xf32>
    %cst_13 = arith.constant 0.00999999977 : f32
    %18 = vector.broadcast %cst_13 : f32 to vector<16x64xf32>
    %19 = arith.mulf %18, %15 : vector<16x64xf32>
    %20 = arith.select %17, %15, %19 : vector<16x64xi1>, vector<16x64xf32>
    %c0_14 = arith.constant 0 : index
    %c0_15 = arith.constant 0 : index
    %21 = vector.load %arg7[%c0_14, %c0_15] : memref<64x16xf32, #tpu.memory_space<vmem>>, vector<64x16xf32>
    %c0_16 = arith.constant 0 : index
    %c0_17 = arith.constant 0 : index
    %22 = vector.load %arg8[%c0_16, %c0_17] : memref<1x16xf32, #tpu.memory_space<vmem>>, vector<1x16xf32>
    %cst_18 = arith.constant dense<0.000000e+00> : vector<16x16xf32>
    %23 = tpu.matmul %20, %21, %cst_18 {dimension_numbers = #tpu.dot_dimension_numbers<[1], [0], [0], [1], [0, 0, 1, 1], [], []>} : vector<16x64xf32>, vector<64x16xf32>, vector<16x16xf32> -> vector<16x16xf32>
    %24 = vector.broadcast %22 : vector<1x16xf32> to vector<16x16xf32>
    %25 = arith.addf %23, %24 : vector<16x16xf32>
    %c0_19 = arith.constant 0 : index
    %c0_20 = arith.constant 0 : index
    %26 = vector.load %arg2[%c0_19, %c0_20] : memref<16x1xi32, #tpu.memory_space<vmem>>, vector<16x1xi32>
    %c0_i32 = arith.constant 0 : i32
    %27 = vector.broadcast %c0_i32 : i32 to vector<16x1xi32>
    %28 = arith.cmpi ne, %26, %27 : vector<16x1xi32>
    %cst_21 = arith.constant 0.000000e+00 : f32
    %29 = vector.broadcast %cst_21 : f32 to vector<16x16xf32>
    %30 = vector.shape_cast %28 : vector<16x1xi1> to vector<16x1xi1>
    %31 = vector.broadcast %30 : vector<16x1xi1> to vector<16x16xi1>
    %32 = arith.select %31, %25, %29 : vector<16x16xi1>, vector<16x16xf32>
    %c0_22 = arith.constant 0 : index
    %c0_23 = arith.constant 0 : index
    %33 = vector.load %arg9[%c0_22, %c0_23] : memref<16x16xf32, #tpu.memory_space<vmem>>, vector<16x16xf32>
    tpu.vector_store %arg9[%c0_22, %c0_23], %32 {strides = array<i32>} : memref<16x16xf32, #tpu.memory_space<vmem>>, vector<16x16xf32>,
    return
  }
  func.func @transform_0(%arg0: i32) -> (i32, i32) {
    %c0_i32 = arith.constant 0 : i32
    %c0_i32_0 = arith.constant 0 : i32
    return %arg0, %c0_i32 : i32, i32
  }
  func.func @transform_1(%arg0: i32) -> (i32, i32) {
    %c0_i32 = arith.constant 0 : i32
    %c0_i32_0 = arith.constant 0 : i32
    return %arg0, %c0_i32 : i32, i32
  }
  func.func @transform_2(%arg0: i32) -> (i32, i32) {
    %c0_i32 = arith.constant 0 : i32
    %c0_i32_0 = arith.constant 0 : i32
    %c0_i32_1 = arith.constant 0 : i32
    return %c0_i32, %c0_i32_0 : i32, i32
  }
  func.func @transform_3(%arg0: i32) -> (i32, i32) {
    %c0_i32 = arith.constant 0 : i32
    %c0_i32_0 = arith.constant 0 : i32
    %c0_i32_1 = arith.constant 0 : i32
    return %c0_i32, %c0_i32_0 : i32, i32
  }
  func.func @transform_4(%arg0: i32) -> (i32, i32) {
    %c0_i32 = arith.constant 0 : i32
    %c0_i32_0 = arith.constant 0 : i32
    %c0_i32_1 = arith.constant 0 : i32
    return %c0_i32, %c0_i32_0 : i32, i32
  }
  func.func @transform_5(%arg0: i32) -> (i32, i32) {
    %c0_i32 = arith.constant 0 : i32
    %c0_i32_0 = arith.constant 0 : i32
    %c0_i32_1 = arith.constant 0 : i32
    return %c0_i32, %c0_i32_0 : i32, i32
  }
  func.func @transform_6(%arg0: i32) -> (i32, i32) {
    %c0_i32 = arith.constant 0 : i32
    %c0_i32_0 = arith.constant 0 : i32
    %c0_i32_1 = arith.constant 0 : i32
    return %c0_i32, %c0_i32_0 : i32, i32
  }
  func.func @transform_7(%arg0: i32) -> (i32, i32) {
    %c0_i32 = arith.constant 0 : i32
    %c0_i32_0 = arith.constant 0 : i32
    %c0_i32_1 = arith.constant 0 : i32
    return %c0_i32, %c0_i32_0 : i32, i32
  }
  func.func @transform_8(%arg0: i32) -> (i32, i32) {
    %c0_i32 = arith.constant 0 : i32
    %c0_i32_0 = arith.constant 0 : i32
    return %arg0, %c0_i32 : i32, i32
  }
}

</mosaic_0001>

<llo_original>
// kernel: tpu_custom_call.1
$region0: #{tpu_custom_call.1}
  #allocation0 [shape = 'u32[]', space=smem, size = 0x4, offset = 0x4, fixed_abs, tag = 'smem constant byte address 0x4 - core index']
  #allocation1 [shape = 'u32[144,128]{1,0:T(1,128)}', space=vmem, size = 0x12000, scoped, tag = 'internal scratch']
  %s0 = inlined_call_operand.hbm [shape: f32[16,32], index: 0, kind: input, shape index: {}]
  %s1 = inlined_call_operand.vmem [shape: s32[16,1], index: 1, kind: input, shape index: {}]
  %s2 = inlined_call_operand.vmem [shape: f32[32,64], index: 2, kind: input, shape index: {}]
  %s3 = inlined_call_operand.vmem [shape: f32[1,64], index: 3, kind: input, shape index: {}]
  %s4 = inlined_call_operand.vmem [shape: f32[64,64], index: 4, kind: input, shape index: {}]
  %s5 = inlined_call_operand.vmem [shape: f32[1,64], index: 5, kind: input, shape index: {}]
  %s6 = inlined_call_operand.vmem [shape: f32[64,16], index: 6, kind: input, shape index: {}]
  %s7 = inlined_call_operand.vmem [shape: f32[1,16], index: 7, kind: input, shape index: {}]
  %s8 = inlined_call_operand.hbm [shape: f32[16,16], index: 8, kind: output, shape index: {}]
  %s9 = sld [smem:[#allocation0]]
  $region46: #{tpu_custom_call.1} parent=0
    _
  %s11 = ssub.s32 1, %s9
  %s12 = scalar_select 0, %s11, %s9
  $region1: #{tpu_custom_call.1} parent=0
    #allocation2 [shape = 'u8[8192]{0}', space=vmem, size = 0x2000, scoped, tag = 'input window, operand 0, single buffered']
    #allocation3 [shape = 's32[1]{0}', space=sflag, size = 0x4, scoped, tag = 'scoped memory for tpu_custom_call.1']
    #allocation4 [shape = 's32[1]{0}', space=sflag, size = 0x4, scoped, tag = 'scoped memory for tpu_custom_call.1']
    #allocation5 [shape = 'u8[8192]{0}', space=vmem, size = 0x2000, scoped, tag = 'output window, operand 0, single buffered']
    %13 = vsyncpa [#allocation3], 0
    %14 = vsyncpa [#allocation4], 0
    // Predicated region
    $region2: #{tpu_custom_call.1} parent=1 // pred_check
      _
    $region3: #{tpu_custom_call.1} parent=1 // pred_check_branch
      %16 = sbr.rel (0) target = $region5
    $region4: #{tpu_custom_call.1} parent=1 // pred_region
      %s18 = ssub.s32 256, 256
      %19 = vsyncadd [#allocation3], %s18
      %s20 = sshll.u32 [#allocation2], 4
      %s21 = int_to_ptr.vmem [resolvable:$true] %s20
      %26 = dma.hbm_to_vmem [thread:$0]  %s0, 256, %s21, [#allocation3], 128, 128, 8
    $region5: #{tpu_custom_call.1} parent=1 // pred_fallthru
      _
    // Predicated region
    $region6: #{tpu_custom_call.1} parent=1 // pred_check
      _
    $region7: #{tpu_custom_call.1} parent=1 // pred_check_branch
      %28 = sbr.rel (0) target = $region9
    $region8: #{tpu_custom_call.1} parent=1 // pred_region
      _
    $region9: #{tpu_custom_call.1} parent=1 // pred_fallthru
      _
    // Predicated region
    $region10: #{tpu_custom_call.1} parent=1 // pred_check
      _
    $region11: #{tpu_custom_call.1} parent=1 // pred_check_branch
      %30 = sbr.rel (0) target = $region13
    $region12: #{tpu_custom_call.1} parent=1 // pred_region
      _
    $region13: #{tpu_custom_call.1} parent=1 // pred_fallthru
      _
    // Predicated region
    $region14: #{tpu_custom_call.1} parent=1 // pred_check
      _
    $region15: #{tpu_custom_call.1} parent=1 // pred_check_branch
      %32 = sbr.rel (0) target = $region17
    $region16: #{tpu_custom_call.1} parent=1 // pred_region
      _
    $region17: #{tpu_custom_call.1} parent=1 // pred_fallthru
      _
    // Predicated region
    $region18: #{tpu_custom_call.1} parent=1 // pred_check
      _
    $region19: #{tpu_custom_call.1} parent=1 // pred_check_branch
      %34 = sbr.rel (0) target = $region21
    $region20: #{tpu_custom_call.1} parent=1 // pred_region
      _
    $region21: #{tpu_custom_call.1} parent=1 // pred_fallthru
      _
    // Predicated region
    $region22: #{tpu_custom_call.1} parent=1 // pred_check
      _
    $region23: #{tpu_custom_call.1} parent=1 // pred_check_branch
      %36 = sbr.rel (0) target = $region25
    $region24: #{tpu_custom_call.1} parent=1 // pred_region
      _
    $region25: #{tpu_custom_call.1} parent=1 // pred_fallthru
      _
    // Predicated region
    $region26: #{tpu_custom_call.1} parent=1 // pred_check
      _
    $region27: #{tpu_custom_call.1} parent=1 // pred_check_branch
      %38 = sbr.rel (0) target = $region29
    $region28: #{tpu_custom_call.1} parent=1 // pred_region
      _
    $region29: #{tpu_custom_call.1} parent=1 // pred_fallthru
      _
    // Predicated region
    $region30: #{tpu_custom_call.1} parent=1 // pred_check
      _
    $region31: #{tpu_custom_call.1} parent=1 // pred_check_branch
      %40 = sbr.rel (0) target = $region33
    $region32: #{tpu_custom_call.1} parent=1 // pred_region
      _
    $region33: #{tpu_custom_call.1} parent=1 // pred_fallthru
      _
    // Predicated region
    $region34: #{tpu_custom_call.1} parent=1 // pred_check
      _
    $region35: #{tpu_custom_call.1} parent=1 // pred_check_branch
      %42 = sbr.rel (0) target = $region37
    $region36: #{tpu_custom_call.1} parent=1 // pred_region
      %43 = dma.done [#allocation3], 256
    $region37: #{tpu_custom_call.1} parent=1 // pred_fallthru
      _
    %v44 = vld [vmem:[#allocation2] sm:$0xff]
    %v45 = vld [vmem:[#allocation2 + $0x8] sm:$0xff]
    %v46 = vld [vmem:[%s2] sm:$0xff]
    %v47 = vld [vmem:[%s2 + $0x8] sm:$0xff]
    %v48 = vld [vmem:[%s2 + $0x10] sm:$0xff]
    %v49 = vld [vmem:[%s2 + $0x18] sm:$0xff]
    %v50 = vld [vmem:[%s3] sm:$0x1]
    %v52 = vlaneseq
    %v53 = vshrl.u32 %v52, 7
    %v54 = vsub.s32 0, %v53
    %v55 = vrot.slane %v50, %v54
    %vm57 = vcmask 261120
    %v59 = vsel %vm57, %v44, 0
    %v62 = vsel %vm57, %v45, 0
    %64 = vmatprep.subr.mxu0 0.0
    %65 = vmatpush1.msra.mxu0 %v46
    %66 = vmatprep.subr.mxu0 0.0
    %67 = vmatpush1.msra.mxu0 %v47
    %68 = vmatprep.subr.mxu0 0.0
    %69 = vmatpush1.msra.mxu0 %v48
    %70 = vmatprep.subr.mxu0 0.0
    %71 = vmatpush1.msra.mxu0 %v49
    %72 = vmatprep.subr.mxu0 0.0
    %73 = vmatpush1.msra.mxu0 0.0
    %74 = vmatprep.subr.mxu0 0.0
    %75 = vmatpush1.msra.mxu0 0.0
    %76 = vmatprep.subr.mxu0 0.0
    %77 = vmatpush1.msra.mxu0 0.0
    %78 = vmatprep.subr.mxu0 0.0
    %79 = vmatpush1.msra.mxu0 0.0
    %80 = vmatprep.subr.mxu0 0.0
    %81 = vmatpush1.msra.mxu0 0.0
    %82 = vmatprep.subr.mxu0 0.0
    %83 = vmatpush1.msra.mxu0 0.0
    %84 = vmatprep.subr.mxu0 0.0
    %85 = vmatpush1.msra.mxu0 0.0
    %86 = vmatprep.subr.mxu0 0.0
    %87 = vmatpush1.msra.mxu0 0.0
    %88 = vmatprep.subr.mxu0 0.0
    %89 = vmatpush1.msra.mxu0 0.0
    %90 = vmatprep.subr.mxu0 0.0
    %91 = vmatpush1.msra.mxu0 0.0
    %92 = vmatprep.subr.mxu0 0.0
    %93 = vmatpush1.msra.mxu0 0.0
    %94 = vmatprep.subr.mxu0 0.0
    %95 = vmatpush1.msra.mxu0 0.0
    %96 = vmatprep.subr.mxu0 0.0
    %97 = vmatpush1.msra.mxu0 0.0
    %98 = vmatprep.subr.mxu0 0.0
    %99 = vmatpush1.msra.mxu0 0.0
    %100 = vmatprep.subr.mxu0 0.0
    %101 = vmatpush1.msra.mxu0 0.0
    %102 = vmatprep.subr.mxu0 0.0
    %103 = vmatpush1.msra.mxu0 0.0
    %104 = vmatprep.subr.mxu0 0.0
    %105 = vmatpush1.msra.mxu0 0.0
    %106 = vmatprep.subr.mxu0 0.0
    %107 = vmatpush1.msra.mxu0 0.0
    %108 = vmatprep.subr.mxu0 0.0
    %109 = vmatpush1.msra.mxu0 0.0
    %110 = vmatprep.subr.mxu0 0.0
    %111 = vmatpush1.msra.mxu0 0.0
    %112 = vmatprep.subr.mxu0 0.0
    %113 = vmatpush1.msra.mxu0 0.0
    %114 = vmatprep.subr.mxu0 0.0
    %115 = vmatpush1.msra.mxu0 0.0
    %116 = vmatprep.subr.mxu0 0.0
    %117 = vmatpush1.msra.mxu0 0.0
    %118 = vmatprep.subr.mxu0 0.0
    %119 = vmatpush1.msra.mxu0 0.0
    %120 = vmatprep.subr.mxu0 0.0
    %121 = vmatpush1.msra.mxu0 0.0
    %122 = vmatprep.subr.mxu0 0.0
    %123 = vmatpush1.msra.mxu0 0.0
    %124 = vmatprep.subr.mxu0 0.0
    %125 = vmatpush1.msra.mxu0 0.0
    %126 = vmatprep.subr.mxu0 0.0
    %127 = vmatpush1.msra.mxu0 0.0
    %128 = vmatprep.mubr.f32.mxu0 0.0
    %129 = vmatmul.mubr.f32.gmra.mrb[0].mxu0 %v59
    %v130 = vpop.f32.mrb[0].mxu0
    %v131 = vadd.f32 %v55, %v130
    %v132 = vpop.f32.mrb[0].mxu0
    %133 = vmatprep.mubr.f32.mxu0 0.0
    %134 = vmatmul.mubr.f32.gmra.mrb[0].mxu0 %v62
    %v135 = vpop.f32.mrb[0].mxu0
    %v136 = vadd.f32 %v55, %v135
    %v137 = vpop.f32.mrb[0].mxu0
    %138 = vdwg.mxu0
    %vm139 = vcmp.ge.f32.partialorder %v131, 0.0
    %vm140 = vcmp.ge.f32.partialorder %v136, 0.0
    %v141 = vmul.f32 %v131, 0.01
    %v142 = vmul.f32 %v136, 0.01
    %v143 = vsel %vm139, %v131, %v141
    %v144 = vsel %vm140, %v136, %v142
    %v145 = vld [vmem:[%s4] sm:$0xff]
    %v146 = vld [vmem:[%s4 + $0x8] sm:$0xff]
    %v147 = vld [vmem:[%s4 + $0x10] sm:$0xff]
    %v148 = vld [vmem:[%s4 + $0x18] sm:$0xff]
    %v149 = vld [vmem:[%s4 + $0x20] sm:$0xff]
    %v150 = vld [vmem:[%s4 + $0x28] sm:$0xff]
    %v151 = vld [vmem:[%s4 + $0x30] sm:$0xff]
    %v152 = vld [vmem:[%s4 + $0x38] sm:$0xff]
    %v153 = vld [vmem:[%s5] sm:$0x1]
    %v155 = vlaneseq
    %v156 = vshrl.u32 %v155, 7
    %v157 = vsub.s32 0, %v156
    %v158 = vrot.slane %v153, %v157
    %vm160 = vcmask 523264
    %v162 = vsel %vm160, %v143, 0
    %v165 = vsel %vm160, %v144, 0
    %167 = vmatprep.subr.mxu0 0.0
    %168 = vmatpush1.msra.mxu0 %v145
    %169 = vmatprep.subr.mxu0 0.0
    %170 = vmatpush1.msra.mxu0 %v146
    %171 = vmatprep.subr.mxu0 0.0
    %172 = vmatpush1.msra.mxu0 %v147
    %173 = vmatprep.subr.mxu0 0.0
    %174 = vmatpush1.msra.mxu0 %v148
    %175 = vmatprep.subr.mxu0 0.0
    %176 = vmatpush1.msra.mxu0 %v149
    %177 = vmatprep.subr.mxu0 0.0
    %178 = vmatpush1.msra.mxu0 %v150
    %179 = vmatprep.subr.mxu0 0.0
    %180 = vmatpush1.msra.mxu0 %v151
    %181 = vmatprep.subr.mxu0 0.0
    %182 = vmatpush1.msra.mxu0 %v152
    %183 = vmatprep.subr.mxu0 0.0
    %184 = vmatpush1.msra.mxu0 0.0
    %185 = vmatprep.subr.mxu0 0.0
    %186 = vmatpush1.msra.mxu0 0.0
    %187 = vmatprep.subr.mxu0 0.0
    %188 = vmatpush1.msra.mxu0 0.0
    %189 = vmatprep.subr.mxu0 0.0
    %190 = vmatpush1.msra.mxu0 0.0
    %191 = vmatprep.subr.mxu0 0.0
    %192 = vmatpush1.msra.mxu0 0.0
    %193 = vmatprep.subr.mxu0 0.0
    %194 = vmatpush1.msra.mxu0 0.0
    %195 = vmatprep.subr.mxu0 0.0
    %196 = vmatpush1.msra.mxu0 0.0
    %197 = vmatprep.subr.mxu0 0.0
    %198 = vmatpush1.msra.mxu0 0.0
    %199 = vmatprep.subr.mxu0 0.0
    %200 = vmatpush1.msra.mxu0 0.0
    %201 = vmatprep.subr.mxu0 0.0
    %202 = vmatpush1.msra.mxu0 0.0
    %203 = vmatprep.subr.mxu0 0.0
    %204 = vmatpush1.msra.mxu0 0.0
    %205 = vmatprep.subr.mxu0 0.0
    %206 = vmatpush1.msra.mxu0 0.0
    %207 = vmatprep.subr.mxu0 0.0
    %208 = vmatpush1.msra.mxu0 0.0
    %209 = vmatprep.subr.mxu0 0.0
    %210 = vmatpush1.msra.mxu0 0.0
    %211 = vmatprep.subr.mxu0 0.0
    %212 = vmatpush1.msra.mxu0 0.0
    %213 = vmatprep.subr.mxu0 0.0
    %214 = vmatpush1.msra.mxu0 0.0
    %215 = vmatprep.subr.mxu0 0.0
    %216 = vmatpush1.msra.mxu0 0.0
    %217 = vmatprep.subr.mxu0 0.0
    %218 = vmatpush1.msra.mxu0 0.0
    %219 = vmatprep.subr.mxu0 0.0
    %220 = vmatpush1.msra.mxu0 0.0
    %221 = vmatprep.subr.mxu0 0.0
    %222 = vmatpush1.msra.mxu0 0.0
    %223 = vmatprep.subr.mxu0 0.0
    %224 = vmatpush1.msra.mxu0 0.0
    %225 = vmatprep.subr.mxu0 0.0
    %226 = vmatpush1.msra.mxu0 0.0
    %227 = vmatprep.subr.mxu0 0.0
    %228 = vmatpush1.msra.mxu0 0.0
    %229 = vmatprep.subr.mxu0 0.0
    %230 = vmatpush1.msra.mxu0 0.0
    %231 = vmatprep.mubr.f32.mxu0 0.0
    %232 = vmatmul.mubr.f32.gmra.mrb[0].mxu0 %v162
    %v233 = vpop.f32.mrb[0].mxu0
    %v234 = vadd.f32 %v158, %v233
    %v235 = vpop.f32.mrb[0].mxu0
    %236 = vmatprep.mubr.f32.mxu0 0.0
    %237 = vmatmul.mubr.f32.gmra.mrb[0].mxu0 %v165
    %v238 = vpop.f32.mrb[0].mxu0
    %v239 = vadd.f32 %v158, %v238
    %v240 = vpop.f32.mrb[0].mxu0
    %241 = vdwg.mxu0
    %vm242 = vcmp.ge.f32.partialorder %v234, 0.0
    %vm243 = vcmp.ge.f32.partialorder %v239, 0.0
    %v244 = vmul.f32 %v234, 0.01
    %v245 = vmul.f32 %v239, 0.01
    %v246 = vsel %vm242, %v234, %v244
    %v247 = vsel %vm243, %v239, %v245
    %v248 = vld [vmem:[%s6] sm:$0xff]
    %v249 = vld [vmem:[%s6 + $0x8] sm:$0xff]
    %v250 = vld [vmem:[%s6 + $0x10] sm:$0xff]
    %v251 = vld [vmem:[%s6 + $0x18] sm:$0xff]
    %v252 = vld [vmem:[%s6 + $0x20] sm:$0xff]
    %v253 = vld [vmem:[%s6 + $0x28] sm:$0xff]
    %v254 = vld [vmem:[%s6 + $0x30] sm:$0xff]
    %v255 = vld [vmem:[%s6 + $0x38] sm:$0xff]
    %v256 = vld [vmem:[%s7] sm:$0x1]
    %v258 = vlaneseq
    %v259 = vshrl.u32 %v258, 7
    %v260 = vsub.s32 0, %v259
    %v261 = vrot.slane %v256, %v260
    %v264 = vsel %vm160, %v246, 0
    %v267 = vsel %vm160, %v247, 0
    %269 = vmatprep.subr.mxu0 0.0
    %270 = vmatpush1.msra.mxu0 %v248
    %271 = vmatprep.subr.mxu0 0.0
    %272 = vmatpush1.msra.mxu0 %v249
    %273 = vmatprep.subr.mxu0 0.0
    %274 = vmatpush1.msra.mxu0 %v250
    %275 = vmatprep.subr.mxu0 0.0
    %276 = vmatpush1.msra.mxu0 %v251
    %277 = vmatprep.subr.mxu0 0.0
    %278 = vmatpush1.msra.mxu0 %v252
    %279 = vmatprep.subr.mxu0 0.0
    %280 = vmatpush1.msra.mxu0 %v253
    %281 = vmatprep.subr.mxu0 0.0
    %282 = vmatpush1.msra.mxu0 %v254
    %283 = vmatprep.subr.mxu0 0.0
    %284 = vmatpush1.msra.mxu0 %v255
    %285 = vmatprep.subr.mxu0 0.0
    %286 = vmatpush1.msra.mxu0 0.0
    %287 = vmatprep.subr.mxu0 0.0
    %288 = vmatpush1.msra.mxu0 0.0
    %289 = vmatprep.subr.mxu0 0.0
    %290 = vmatpush1.msra.mxu0 0.0
    %291 = vmatprep.subr.mxu0 0.0
    %292 = vmatpush1.msra.mxu0 0.0
    %293 = vmatprep.subr.mxu0 0.0
    %294 = vmatpush1.msra.mxu0 0.0
    %295 = vmatprep.subr.mxu0 0.0
    %296 = vmatpush1.msra.mxu0 0.0
    %297 = vmatprep.subr.mxu0 0.0
    %298 = vmatpush1.msra.mxu0 0.0
    %299 = vmatprep.subr.mxu0 0.0
    %300 = vmatpush1.msra.mxu0 0.0
    %301 = vmatprep.subr.mxu0 0.0
    %302 = vmatpush1.msra.mxu0 0.0
    %303 = vmatprep.subr.mxu0 0.0
    %304 = vmatpush1.msra.mxu0 0.0
    %305 = vmatprep.subr.mxu0 0.0
    %306 = vmatpush1.msra.mxu0 0.0
    %307 = vmatprep.subr.mxu0 0.0
    %308 = vmatpush1.msra.mxu0 0.0
    %309 = vmatprep.subr.mxu0 0.0
    %310 = vmatpush1.msra.mxu0 0.0
    %311 = vmatprep.subr.mxu0 0.0
    %312 = vmatpush1.msra.mxu0 0.0
    %313 = vmatprep.subr.mxu0 0.0
    %314 = vmatpush1.msra.mxu0 0.0
    %315 = vmatprep.subr.mxu0 0.0
    %316 = vmatpush1.msra.mxu0 0.0
    %317 = vmatprep.subr.mxu0 0.0
    %318 = vmatpush1.msra.mxu0 0.0
    %319 = vmatprep.subr.mxu0 0.0
    %320 = vmatpush1.msra.mxu0 0.0
    %321 = vmatprep.subr.mxu0 0.0
    %322 = vmatpush1.msra.mxu0 0.0
    %323 = vmatprep.subr.mxu0 0.0
    %324 = vmatpush1.msra.mxu0 0.0
    %325 = vmatprep.subr.mxu0 0.0
    %326 = vmatpush1.msra.mxu0 0.0
    %327 = vmatprep.subr.mxu0 0.0
    %328 = vmatpush1.msra.mxu0 0.0
    %329 = vmatprep.subr.mxu0 0.0
    %330 = vmatpush1.msra.mxu0 0.0
    %331 = vmatprep.subr.mxu0 0.0
    %332 = vmatpush1.msra.mxu0 0.0
    %333 = vmatprep.mubr.f32.mxu0 0.0
    %334 = vmatmul.mubr.f32.gmra.mrb[0].mxu0 %v264
    %v335 = vpop.f32.mrb[0].mxu0
    %v336 = vadd.f32 %v261, %v335
    %v337 = vpop.f32.mrb[0].mxu0
    %338 = vmatprep.mubr.f32.mxu0 0.0
    %339 = vmatmul.mubr.f32.gmra.mrb[0].mxu0 %v267
    %v340 = vpop.f32.mrb[0].mxu0
    %v341 = vadd.f32 %v261, %v340
    %v342 = vpop.f32.mrb[0].mxu0
    %343 = vdwg.mxu0
    %v344 = vld [vmem:[%s1] sm:$0xff]
    %v345 = vld [vmem:[%s1 + $0x8] sm:$0xff]
    %vm346 = vcmp.ne.s32.totalorder %v344, 0
    %vm347 = vcmp.ne.s32.totalorder %v345, 0
    %v348 = vsel %vm346, 1, 0
    %v349 = vsel %vm347, 1, 0
    %350 = vset.pattern.permute.xlu0 0
    %351 = vperm.xlu0 %350, %v348
    %v352 = vpop.permute.xlu0 %351
    %353 = vset.pattern.permute.xlu0 0
    %354 = vperm.xlu0 %353, %v349
    %v355 = vpop.permute.xlu0 %354
    %vm356 = vcmp.eq.s32.totalorder %v352, 1
    %vm357 = vcmp.eq.s32.totalorder %v355, 1
    %v358 = vsel %vm356, %v336, 0.0
    %v359 = vsel %vm357, %v341, 0.0
    %vm360 = vcmask 130048
    %361 = vst.msk [vmem:[#allocation5] sm:$0xff] %vm360, %v358
    %362 = vst.msk [vmem:[#allocation5 + $0x8] sm:$0xff] %vm360, %v359
    // Predicated region
    $region38: #{tpu_custom_call.1} parent=1 // pred_check
      _
    $region39: #{tpu_custom_call.1} parent=1 // pred_check_branch
      %364 = sbr.rel (0) target = $region41
    $region40: #{tpu_custom_call.1} parent=1 // pred_region
      %s366 = ssub.s32 256, 256
      %367 = vsyncadd [#allocation4], %s366
      %s368 = sshll.u32 [#allocation5], 4
      %s369 = int_to_ptr.vmem [resolvable:$true] %s368
      %374 = dma.vmem_to_hbm [thread:$0]  %s369, 256, %s8, [#allocation4], 128, 128, 8
    $region41: #{tpu_custom_call.1} parent=1 // pred_fallthru
      _
    // Predicated region
    $region42: #{tpu_custom_call.1} parent=1 // pred_check
      _
    $region43: #{tpu_custom_call.1} parent=1 // pred_check_branch
      %376 = sbr.rel (0) target = $region45
    $region44: #{tpu_custom_call.1} parent=1 // pred_region
      %377 = dma.done [#allocation4], 256
    $region45: #{tpu_custom_call.1} parent=1 // pred_fallthru
      _
    %378 = vsyncpa [#allocation3], 1
    %379 = vsyncpa [#allocation4], 1

</llo_original>
